<compile_context>
chip_gen: v7x
topology: tpu7x:2x2x1
jax: 0.10.0
libtpu: 0.0.40
codegen_flags: <defaults>
</compile_context>

<pallas_src>
import functools
import math

import jax
import jax.numpy as jnp
from jax.experimental import pallas as pl
from jax.experimental.pallas import tpu as pltpu


def _round_up(n: int, m: int) -> int:
    return ((n + m - 1) // m) * m


def _fused_mlp_kernel(*refs, n_layers: int, layer_out_dims, compute_dtype):
    """Whole MLP in one kernel.

    refs = (x_ref, w_0, ..., w_{L-1}, b_all_ref, o_ref)
      x_ref  : (bm, D0)                 w_i : (D_i, D_{i+1})   (pre-cast dtype)
      b_all_ref : (n_layers, bw) f32    o_ref : (bm, D_L_padded)  lane-dense
    Hidden activations never leave VMEM/vregs; only the final padded tile is
    stored (unmasked full-lane store).
    """
    x_ref = refs[0]
    b_all_ref = refs[1 + n_layers]
    o_ref = refs[2 + n_layers]

    # Single cast of the input into the MXU operand dtype (no f32 round-trip).
    h = x_ref[...].astype(compute_dtype)
    for i in range(n_layers):
        w_ref = refs[1 + i]
        dout = layer_out_dims[i]
        # MXU matmul with f32 accumulation; weights already in compute_dtype.
        y = jnp.dot(h, w_ref[...], preferred_element_type=jnp.float32)
        # f32 epilogue: bias row from the single coalesced bias operand
        # (static slice -> zero-cost view).
        y = y + b_all_ref[i:i + 1, :dout]
        if i < n_layers - 1:
            y = jnp.maximum(y, 0.0)          # ReLU on hidden layers only
            h = y.astype(compute_dtype)      # operand dtype for next matmul
        else:
            h = y
    # Final layer width is a multiple of 128 -> unmasked full-lane store.
    o_ref[...] = h.astype(o_ref.dtype)


def prepare_mlp_operands(params, *, compute_dtype=jnp.float32):
    """One-time parameter preparation (do NOT redo per forward call).

    - Weights pre-cast to `compute_dtype` in HBM (no per-call in-kernel cast;
      halves weight DMA bytes on the bf16 path).
    - Last layer's W/b zero-padded along Dout to a multiple of 128 so the
      kernel's only HBM store is lane-dense.
    - All biases coalesced into one (n_layers, bw) f32 operand.

    NOTE (v5e): keep compute_dtype=float32 at tiny feature dims; the v5e VPU
    has no bf16 ALU, so bf16 operand casts are pure extra work there.
    """
    n_layers = len(params)
    out_dim = params[-1][0].shape[1]
    out_pad = _round_up(max(out_dim, 128), 128)

    ws = []
    bs = []
    layer_out_dims = []
    for i, (w, b) in enumerate(params):
        if i == n_layers - 1 and w.shape[1] != out_pad:
            w = jnp.pad(w, ((0, 0), (0, out_pad - w.shape[1])))
            b = jnp.pad(b, (0, out_pad - b.shape[0]))
        ws.append(w.astype(compute_dtype))
        bs.append(b.astype(jnp.float32))
        layer_out_dims.append(w.shape[1])

    bw = _round_up(max(layer_out_dims), 128)
    b_all = jnp.stack([jnp.pad(b, (0, bw - b.shape[0])) for b in bs], axis=0)

    return dict(
        ws=ws,
        b_all=b_all,
        layer_out_dims=tuple(layer_out_dims),
        out_dim=out_dim,
        out_pad=out_pad,
        compute_dtype=compute_dtype,
    )


def mlp_forward(x, prepared, *, block_batch=256):
    """Fused MLP forward as a single pallas_call.

    prepared: output of prepare_mlp_operands (weights pre-cast / padded,
    biases coalesced).  Batch is tiled into a "parallel" grid axis of
    `block_batch` rows when divisible (shards across v7x's two TensorCores and
    keeps MXU tiles tall on v6e/v7x); otherwise a single whole-batch step.
    """
    ws = prepared["ws"]
    b_all = prepared["b_all"]
    layer_out_dims = prepared["layer_out_dims"]
    out_dim = prepared["out_dim"]
    out_pad = prepared["out_pad"]
    compute_dtype = prepared["compute_dtype"]

    n_layers = len(ws)
    B, din = x.shape

    bm = block_batch if (B % block_batch == 0) else B
    grid = (B // bm,)

    kernel = functools.partial(
        _fused_mlp_kernel,
        n_layers=n_layers,
        layer_out_dims=layer_out_dims,
        compute_dtype=compute_dtype,
    )

    # x / output are tiled along batch; weights and the coalesced bias use a
    # constant index_map -> DMA'd once, resident in VMEM across all batch tiles.
    in_specs = [pl.BlockSpec((bm, din), lambda i: (i, 0))]
    for w in ws:
        in_specs.append(pl.BlockSpec(w.shape, lambda i: (0, 0)))
    in_specs.append(pl.BlockSpec(b_all.shape, lambda i: (0, 0)))
    out_specs = pl.BlockSpec((bm, out_pad), lambda i: (i, 0))

    # Explicit scoped-VMEM budget with generous headroom (double-buffered x/out
    # blocks + resident weights/bias + f32 intermediates).  Keeps the same
    # tiling portable to v7x's smaller (64 MiB) VMEM.
    bytes_needed = (
        2 * bm * din * x.dtype.itemsize
        + sum(w.size * w.dtype.itemsize for w in ws)
        + b_all.size * b_all.dtype.itemsize
        + 2 * bm * out_pad * x.dtype.itemsize
        + 8 * bm * max(layer_out_dims) * 4
    )
    vmem_limit = int(min(max(4 * bytes_needed, 16 << 20), 64 << 20))

    out_padded = pl.pallas_call(
        kernel,
        out_shape=jax.ShapeDtypeStruct((B, out_pad), x.dtype),
        grid=grid,
        in_specs=in_specs,
        out_specs=out_specs,
        compiler_params=pltpu.CompilerParams(
            dimension_semantics=("parallel",),
            vmem_limit_bytes=vmem_limit,
        ),
    )(x, *ws, b_all)

    # Drop the lane padding added for the lane-dense store.
    return out_padded[:, :out_dim]

    # TODO(synk): if this MLP is called every decode step, keep the (tiny)
    # weight set resident across calls via the cross-pallas_call prefetch /
    # persistent-VMEM pattern instead of re-DMAing it each call.


def init_mlp_params(key, input_dim, hidden_dims, output_dim, dtype=jnp.float32):
    """Deterministic PyTorch-style (Kaiming-uniform / uniform-bias) init.

    Weights stored transposed relative to nn.Linear: shape (Din, Dout).
    """
    dims = [input_dim] + list(hidden_dims) + [output_dim]
    params = []
    for din, dout in zip(dims[:-1], dims[1:]):
        key, kw, kb = jax.random.split(key, 3)
        bound = 1.0 / math.sqrt(din)
        w = jax.random.uniform(kw, (din, dout), dtype, minval=-bound, maxval=bound)
        b = jax.random.uniform(kb, (dout,), dtype, minval=-bound, maxval=bound)
        params.append((w, b))
    return params


if __name__ == "__main__":
    # Model config consistent with MLP.forward(): x is (batch, input_dim).
    batch = 8
    input_dim = 32
    hidden_dims = [64, 32]
    output_dim = 16

    key = jax.random.PRNGKey(0)
    kx, kp = jax.random.split(key)
    x = jax.random.normal(kx, (batch, input_dim), dtype=jnp.float32)
    params = init_mlp_params(kp, input_dim, hidden_dims, output_dim)

    # f32 MXU operands (default; exact PyTorch-default forward semantics and
    # the right choice on v5e at these tiny feature dims).
    prepared_f32 = prepare_mlp_operands(params, compute_dtype=jnp.float32)
    out_f32 = jax.block_until_ready(mlp_forward(x, prepared_f32))

    # bf16 MXU operands (v6e/v7x fast path): weights pre-cast in HBM, f32
    # accumulation and f32 bias/ReLU epilogue.  Not bit-exact vs f32.
    prepared_bf16 = prepare_mlp_operands(params, compute_dtype=jnp.bfloat16)
    out_bf16 = jax.block_until_ready(mlp_forward(x, prepared_bf16))

    # Pure-JAX reference of the fused forward pass.
    ref = x
    for i, (w, b) in enumerate(params):
        ref = ref @ w + b
        if i < len(params) - 1:
            ref = jnp.maximum(ref, 0.0)

    assert out_f32.shape == (batch, output_dim)
    assert jnp.allclose(out_f32, ref, atol=1e-5, rtol=1e-5)
    assert jnp.allclose(out_bf16, ref, atol=5e-2, rtol=5e-2)

    # TODO(synk): dropout / batch_norm / layer_norm / non-ReLU activation
    # branches of MLP.__init__ are disabled in the default config and are not
    # implemented here.
    print("KERNEL_OK")
</pallas_src>

<mosaic_0001>
module attributes {stable_mosaic.version = 11 : i64} {
  func.func @_fused_mlp_kernel(%arg0: i32, %arg1: memref<8x32xf32, #tpu.memory_space<vmem>>, %arg2: memref<32x64xf32, #tpu.memory_space<vmem>>, %arg3: memref<64x32xf32, #tpu.memory_space<vmem>>, %arg4: memref<32x128xf32, #tpu.memory_space<vmem>>, %arg5: memref<3x128xf32, #tpu.memory_space<vmem>>, %arg6: memref<8x128xf32, #tpu.memory_space<vmem>>) attributes {dimension_semantics = [#tpu.dimension_semantics<parallel>], iteration_bounds = array<i64: 1>, scalar_prefetch = 0 : i64, scratch_operands = 0 : i64, tpu.core_type = #tpu.core_type<tc>, window_params = [{transform_indices = @transform_0, window_bounds = array<i64: 8, 32>}, {pipeline_mode = #tpu.pipeline_mode<synchronous>, transform_indices = @transform_1, window_bounds = array<i64: 32, 64>}, {pipeline_mode = #tpu.pipeline_mode<synchronous>, transform_indices = @transform_2, window_bounds = array<i64: 64, 32>}, {pipeline_mode = #tpu.pipeline_mode<synchronous>, transform_indices = @transform_3, window_bounds = array<i64: 32, 128>}, {pipeline_mode = #tpu.pipeline_mode<synchronous>, transform_indices = @transform_4, window_bounds = array<i64: 3, 128>}, {transform_indices = @transform_5, window_bounds = array<i64: 8, 128>}]} {
    %c0 = arith.constant 0 : index
    %c0_0 = arith.constant 0 : index
    %0 = vector.load %arg1[%c0, %c0_0] : memref<8x32xf32, #tpu.memory_space<vmem>>, vector<8x32xf32>
    %c0_1 = arith.constant 0 : index
    %c0_2 = arith.constant 0 : index
    %1 = vector.load %arg2[%c0_1, %c0_2] : memref<32x64xf32, #tpu.memory_space<vmem>>, vector<32x64xf32>
    %cst = arith.constant dense<0.000000e+00> : vector<8x64xf32>
    %2 = tpu.matmul %0, %1, %cst {dimension_numbers = #tpu.dot_dimension_numbers<[1], [0], [0], [1], [0, 0, 1, 1], [], []>} : vector<8x32xf32>, vector<32x64xf32>, vector<8x64xf32> -> vector<8x64xf32>
    %c0_3 = arith.constant 0 : index
    %c0_4 = arith.constant 0 : index
    %3 = vector.load %arg5[%c0_3, %c0_4] : memref<3x128xf32, #tpu.memory_space<vmem>>, vector<1x64xf32>
    %4 = vector.broadcast %3 : vector<1x64xf32> to vector<8x64xf32>
    %5 = arith.addf %2, %4 : vector<8x64xf32>
    %cst_5 = arith.constant 0.000000e+00 : f32
    %6 = vector.broadcast %cst_5 : f32 to vector<8x64xf32>
    %7 = arith.maximumf %5, %6 : vector<8x64xf32>
    %c0_6 = arith.constant 0 : index
    %c0_7 = arith.constant 0 : index
    %8 = vector.load %arg3[%c0_6, %c0_7] : memref<64x32xf32, #tpu.memory_space<vmem>>, vector<64x32xf32>
    %cst_8 = arith.constant dense<0.000000e+00> : vector<8x32xf32>
    %9 = tpu.matmul %7, %8, %cst_8 {dimension_numbers = #tpu.dot_dimension_numbers<[1], [0], [0], [1], [0, 0, 1, 1], [], []>} : vector<8x64xf32>, vector<64x32xf32>, vector<8x32xf32> -> vector<8x32xf32>
    %c1 = arith.constant 1 : index
    %c0_9 = arith.constant 0 : index
    %10 = vector.load %arg5[%c1, %c0_9] : memref<3x128xf32, #tpu.memory_space<vmem>>, vector<1x32xf32>
    %11 = vector.broadcast %10 : vector<1x32xf32> to vector<8x32xf32>
    %12 = arith.addf %9, %11 : vector<8x32xf32>
    %cst_10 = arith.constant 0.000000e+00 : f32
    %13 = vector.broadcast %cst_10 : f32 to vector<8x32xf32>
    %14 = arith.maximumf %12, %13 : vector<8x32xf32>
    %c0_11 = arith.constant 0 : index
    %c0_12 = arith.constant 0 : index
    %15 = vector.load %arg4[%c0_11, %c0_12] : memref<32x128xf32, #tpu.memory_space<vmem>>, vector<32x128xf32>
    %cst_13 = arith.constant dense<0.000000e+00> : vector<8x128xf32>
    %16 = tpu.matmul %14, %15, %cst_13 {dimension_numbers = #tpu.dot_dimension_numbers<[1], [0], [0], [1], [0, 0, 1, 1], [], []>} : vector<8x32xf32>, vector<32x128xf32>, vector<8x128xf32> -> vector<8x128xf32>
    %c2 = arith.constant 2 : index
    %c0_14 = arith.constant 0 : index
    %17 = vector.load %arg5[%c2, %c0_14] : memref<3x128xf32, #tpu.memory_space<vmem>>, vector<1x128xf32>
    %18 = vector.broadcast %17 : vector<1x128xf32> to vector<8x128xf32>
    %19 = arith.addf %16, %18 : vector<8x128xf32>
    %c0_15 = arith.constant 0 : index
    %c0_16 = arith.constant 0 : index
    %20 = vector.load %arg6[%c0_15, %c0_16] : memref<8x128xf32, #tpu.memory_space<vmem>>, vector<8x128xf32>
    tpu.vector_store %arg6[%c0_15, %c0_16], %19 {strides = array<i32>} : memref<8x128xf32, #tpu.memory_space<vmem>>, vector<8x128xf32>,
    return
  }
  func.func @transform_0(%arg0: i32) -> (i32, i32) {
    %c0_i32 = arith.constant 0 : i32
    %c0_i32_0 = arith.constant 0 : i32
    return %arg0, %c0_i32 : i32, i32
  }
  func.func @transform_1(%arg0: i32) -> (i32, i32) {
    %c0_i32 = arith.constant 0 : i32
    %c0_i32_0 = arith.constant 0 : i32
    %c0_i32_1 = arith.constant 0 : i32
    return %c0_i32, %c0_i32_0 : i32, i32
  }
  func.func @transform_2(%arg0: i32) -> (i32, i32) {
    %c0_i32 = arith.constant 0 : i32
    %c0_i32_0 = arith.constant 0 : i32
    %c0_i32_1 = arith.constant 0 : i32
    return %c0_i32, %c0_i32_0 : i32, i32
  }
  func.func @transform_3(%arg0: i32) -> (i32, i32) {
    %c0_i32 = arith.constant 0 : i32
    %c0_i32_0 = arith.constant 0 : i32
    %c0_i32_1 = arith.constant 0 : i32
    return %c0_i32, %c0_i32_0 : i32, i32
  }
  func.func @transform_4(%arg0: i32) -> (i32, i32) {
    %c0_i32 = arith.constant 0 : i32
    %c0_i32_0 = arith.constant 0 : i32
    %c0_i32_1 = arith.constant 0 : i32
    return %c0_i32, %c0_i32_0 : i32, i32
  }
  func.func @transform_5(%arg0: i32) -> (i32, i32) {
    %c0_i32 = arith.constant 0 : i32
    %c0_i32_0 = arith.constant 0 : i32
    return %arg0, %c0_i32 : i32, i32
  }
}

</mosaic_0001>

<llo_original>
// kernel: tpu_custom_call.1
$region0: #{tpu_custom_call.1}
  #allocation0 [shape = 'u32[]', space=smem, size = 0x4, offset = 0x4, fixed_abs, tag = 'smem constant byte address 0x4 - core index']
  #allocation1 [shape = 'u32[144,128]{1,0:T(1,128)}', space=vmem, size = 0x12000, scoped, tag = 'internal scratch']
  %s0 = inlined_call_operand.vmem [shape: f32[8,32], index: 0, kind: input, shape index: {}]
  %s1 = inlined_call_operand.vmem [shape: f32[32,64], index: 1, kind: input, shape index: {}]
  %s2 = inlined_call_operand.vmem [shape: f32[64,32], index: 2, kind: input, shape index: {}]
  %s3 = inlined_call_operand.vmem [shape: f32[32,128], index: 3, kind: input, shape index: {}]
  %s4 = inlined_call_operand.vmem [shape: f32[3,128], index: 4, kind: input, shape index: {}]
  %s5 = inlined_call_operand.hbm [shape: f32[8,128], index: 5, kind: output, shape index: {}]
  %s6 = sld [smem:[#allocation0]]
  $region30: #{tpu_custom_call.1} parent=0
    _
  %s8 = ssub.s32 1, %s6
  %s9 = scalar_select 0, %s8, %s6
  $region1: #{tpu_custom_call.1} parent=0
    #allocation2 [shape = 'u8[4096]{0}', space=vmem, size = 0x1000, scoped, tag = 'output window, operand 0, single buffered']
    #allocation3 [shape = 's32[1]{0}', space=sflag, size = 0x4, scoped, tag = 'scoped memory for tpu_custom_call.1']
    %10 = vsyncpa [#allocation3], 0
    // Predicated region
    $region2: #{tpu_custom_call.1} parent=1 // pred_check
      _
    $region3: #{tpu_custom_call.1} parent=1 // pred_check_branch
      %12 = sbr.rel (0) target = $region5
    $region4: #{tpu_custom_call.1} parent=1 // pred_region
      _
    $region5: #{tpu_custom_call.1} parent=1 // pred_fallthru
      _
    // Predicated region
    $region6: #{tpu_custom_call.1} parent=1 // pred_check
      _
    $region7: #{tpu_custom_call.1} parent=1 // pred_check_branch
      %14 = sbr.rel (0) target = $region9
    $region8: #{tpu_custom_call.1} parent=1 // pred_region
      _
    $region9: #{tpu_custom_call.1} parent=1 // pred_fallthru
      _
    // Predicated region
    $region10: #{tpu_custom_call.1} parent=1 // pred_check
      _
    $region11: #{tpu_custom_call.1} parent=1 // pred_check_branch
      %16 = sbr.rel (0) target = $region13
    $region12: #{tpu_custom_call.1} parent=1 // pred_region
      _
    $region13: #{tpu_custom_call.1} parent=1 // pred_fallthru
      _
    // Predicated region
    $region14: #{tpu_custom_call.1} parent=1 // pred_check
      _
    $region15: #{tpu_custom_call.1} parent=1 // pred_check_branch
      %18 = sbr.rel (0) target = $region17
    $region16: #{tpu_custom_call.1} parent=1 // pred_region
      _
    $region17: #{tpu_custom_call.1} parent=1 // pred_fallthru
      _
    // Predicated region
    $region18: #{tpu_custom_call.1} parent=1 // pred_check
      _
    $region19: #{tpu_custom_call.1} parent=1 // pred_check_branch
      %20 = sbr.rel (0) target = $region21
    $region20: #{tpu_custom_call.1} parent=1 // pred_region
      _
    $region21: #{tpu_custom_call.1} parent=1 // pred_fallthru
      _
    %v21 = vld [vmem:[%s0] sm:$0xff]
    %v22 = vld [vmem:[%s1] sm:$0xff]
    %v23 = vld [vmem:[%s1 + $0x8] sm:$0xff]
    %v24 = vld [vmem:[%s1 + $0x10] sm:$0xff]
    %v25 = vld [vmem:[%s1 + $0x18] sm:$0xff]
    %v26 = vld [vmem:[%s4] sm:$0x1]
    %v27 = vlaneseq
    %v28 = vshrl.u32 %v27, 7
    %v29 = vsub.s32 0, %v28
    %v30 = vrot.slane %v26, %v29
    %vm31 = vcmask 261120
    %v33 = vsel %vm31, %v21, 0
    %35 = vmatprep.subr.mxu0 0.0
    %36 = vmatpush1.msra.mxu0 %v22
    %37 = vmatprep.subr.mxu0 0.0
    %38 = vmatpush1.msra.mxu0 %v23
    %39 = vmatprep.subr.mxu0 0.0
    %40 = vmatpush1.msra.mxu0 %v24
    %41 = vmatprep.subr.mxu0 0.0
    %42 = vmatpush1.msra.mxu0 %v25
    %43 = vmatprep.subr.mxu0 0.0
    %44 = vmatpush1.msra.mxu0 0.0
    %45 = vmatprep.subr.mxu0 0.0
    %46 = vmatpush1.msra.mxu0 0.0
    %47 = vmatprep.subr.mxu0 0.0
    %48 = vmatpush1.msra.mxu0 0.0
    %49 = vmatprep.subr.mxu0 0.0
    %50 = vmatpush1.msra.mxu0 0.0
    %51 = vmatprep.subr.mxu0 0.0
    %52 = vmatpush1.msra.mxu0 0.0
    %53 = vmatprep.subr.mxu0 0.0
    %54 = vmatpush1.msra.mxu0 0.0
    %55 = vmatprep.subr.mxu0 0.0
    %56 = vmatpush1.msra.mxu0 0.0
    %57 = vmatprep.subr.mxu0 0.0
    %58 = vmatpush1.msra.mxu0 0.0
    %59 = vmatprep.subr.mxu0 0.0
    %60 = vmatpush1.msra.mxu0 0.0
    %61 = vmatprep.subr.mxu0 0.0
    %62 = vmatpush1.msra.mxu0 0.0
    %63 = vmatprep.subr.mxu0 0.0
    %64 = vmatpush1.msra.mxu0 0.0
    %65 = vmatprep.subr.mxu0 0.0
    %66 = vmatpush1.msra.mxu0 0.0
    %67 = vmatprep.subr.mxu0 0.0
    %68 = vmatpush1.msra.mxu0 0.0
    %69 = vmatprep.subr.mxu0 0.0
    %70 = vmatpush1.msra.mxu0 0.0
    %71 = vmatprep.subr.mxu0 0.0
    %72 = vmatpush1.msra.mxu0 0.0
    %73 = vmatprep.subr.mxu0 0.0
    %74 = vmatpush1.msra.mxu0 0.0
    %75 = vmatprep.subr.mxu0 0.0
    %76 = vmatpush1.msra.mxu0 0.0
    %77 = vmatprep.subr.mxu0 0.0
    %78 = vmatpush1.msra.mxu0 0.0
    %79 = vmatprep.subr.mxu0 0.0
    %80 = vmatpush1.msra.mxu0 0.0
    %81 = vmatprep.subr.mxu0 0.0
    %82 = vmatpush1.msra.mxu0 0.0
    %83 = vmatprep.subr.mxu0 0.0
    %84 = vmatpush1.msra.mxu0 0.0
    %85 = vmatprep.subr.mxu0 0.0
    %86 = vmatpush1.msra.mxu0 0.0
    %87 = vmatprep.subr.mxu0 0.0
    %88 = vmatpush1.msra.mxu0 0.0
    %89 = vmatprep.subr.mxu0 0.0
    %90 = vmatpush1.msra.mxu0 0.0
    %91 = vmatprep.subr.mxu0 0.0
    %92 = vmatpush1.msra.mxu0 0.0
    %93 = vmatprep.subr.mxu0 0.0
    %94 = vmatpush1.msra.mxu0 0.0
    %95 = vmatprep.subr.mxu0 0.0
    %96 = vmatpush1.msra.mxu0 0.0
    %97 = vmatprep.subr.mxu0 0.0
    %98 = vmatpush1.msra.mxu0 0.0
    %99 = vmatprep.mubr.f32.mxu0 0.0
    %100 = vmatmul.mubr.f32.gmra.mrb[0].mxu0 %v33
    %v101 = vpop.f32.mrb[0].mxu0
    %v102 = vadd.f32 %v30, %v101
    %v103 = vpop.f32.mrb[0].mxu0
    %104 = vdwg.mxu0
    %v105 = vmax.f32 %v102, 0.0
    %v106 = vld [vmem:[%s2] sm:$0xff]
    %v107 = vld [vmem:[%s2 + $0x8] sm:$0xff]
    %v108 = vld [vmem:[%s2 + $0x10] sm:$0xff]
    %v109 = vld [vmem:[%s2 + $0x18] sm:$0xff]
    %v110 = vld [vmem:[%s2 + $0x20] sm:$0xff]
    %v111 = vld [vmem:[%s2 + $0x28] sm:$0xff]
    %v112 = vld [vmem:[%s2 + $0x30] sm:$0xff]
    %v113 = vld [vmem:[%s2 + $0x38] sm:$0xff]
    %v114 = vld [vmem:[%s4 + $0x1] sm:$0x1]
    %v115 = vlaneseq
    %v116 = vshrl.u32 %v115, 7
    %v117 = vsub.s32 0, %v116
    %v118 = vrot.slane %v114, %v117
    %vm119 = vcmask 523264
    %v121 = vsel %vm119, %v105, 0
    %123 = vmatprep.subr.mxu0 0.0
    %124 = vmatpush1.msra.mxu0 %v106
    %125 = vmatprep.subr.mxu0 0.0
    %126 = vmatpush1.msra.mxu0 %v107
    %127 = vmatprep.subr.mxu0 0.0
    %128 = vmatpush1.msra.mxu0 %v108
    %129 = vmatprep.subr.mxu0 0.0
    %130 = vmatpush1.msra.mxu0 %v109
    %131 = vmatprep.subr.mxu0 0.0
    %132 = vmatpush1.msra.mxu0 %v110
    %133 = vmatprep.subr.mxu0 0.0
    %134 = vmatpush1.msra.mxu0 %v111
    %135 = vmatprep.subr.mxu0 0.0
    %136 = vmatpush1.msra.mxu0 %v112
    %137 = vmatprep.subr.mxu0 0.0
    %138 = vmatpush1.msra.mxu0 %v113
    %139 = vmatprep.subr.mxu0 0.0
    %140 = vmatpush1.msra.mxu0 0.0
    %141 = vmatprep.subr.mxu0 0.0
    %142 = vmatpush1.msra.mxu0 0.0
    %143 = vmatprep.subr.mxu0 0.0
    %144 = vmatpush1.msra.mxu0 0.0
    %145 = vmatprep.subr.mxu0 0.0
    %146 = vmatpush1.msra.mxu0 0.0
    %147 = vmatprep.subr.mxu0 0.0
    %148 = vmatpush1.msra.mxu0 0.0
    %149 = vmatprep.subr.mxu0 0.0
    %150 = vmatpush1.msra.mxu0 0.0
    %151 = vmatprep.subr.mxu0 0.0
    %152 = vmatpush1.msra.mxu0 0.0
    %153 = vmatprep.subr.mxu0 0.0
    %154 = vmatpush1.msra.mxu0 0.0
    %155 = vmatprep.subr.mxu0 0.0
    %156 = vmatpush1.msra.mxu0 0.0
    %157 = vmatprep.subr.mxu0 0.0
    %158 = vmatpush1.msra.mxu0 0.0
    %159 = vmatprep.subr.mxu0 0.0
    %160 = vmatpush1.msra.mxu0 0.0
    %161 = vmatprep.subr.mxu0 0.0
    %162 = vmatpush1.msra.mxu0 0.0
    %163 = vmatprep.subr.mxu0 0.0
    %164 = vmatpush1.msra.mxu0 0.0
    %165 = vmatprep.subr.mxu0 0.0
    %166 = vmatpush1.msra.mxu0 0.0
    %167 = vmatprep.subr.mxu0 0.0
    %168 = vmatpush1.msra.mxu0 0.0
    %169 = vmatprep.subr.mxu0 0.0
    %170 = vmatpush1.msra.mxu0 0.0
    %171 = vmatprep.subr.mxu0 0.0
    %172 = vmatpush1.msra.mxu0 0.0
    %173 = vmatprep.subr.mxu0 0.0
    %174 = vmatpush1.msra.mxu0 0.0
    %175 = vmatprep.subr.mxu0 0.0
    %176 = vmatpush1.msra.mxu0 0.0
    %177 = vmatprep.subr.mxu0 0.0
    %178 = vmatpush1.msra.mxu0 0.0
    %179 = vmatprep.subr.mxu0 0.0
    %180 = vmatpush1.msra.mxu0 0.0
    %181 = vmatprep.subr.mxu0 0.0
    %182 = vmatpush1.msra.mxu0 0.0
    %183 = vmatprep.subr.mxu0 0.0
    %184 = vmatpush1.msra.mxu0 0.0
    %185 = vmatprep.subr.mxu0 0.0
    %186 = vmatpush1.msra.mxu0 0.0
    %187 = vmatprep.mubr.f32.mxu0 0.0
    %188 = vmatmul.mubr.f32.gmra.mrb[0].mxu0 %v121
    %v189 = vpop.f32.mrb[0].mxu0
    %v190 = vadd.f32 %v118, %v189
    %v191 = vpop.f32.mrb[0].mxu0
    %192 = vdwg.mxu0
    %v193 = vmax.f32 %v190, 0.0
    %v194 = vld [vmem:[%s3] sm:$0xff]
    %v195 = vld [vmem:[%s3 + $0x8] sm:$0xff]
    %v196 = vld [vmem:[%s3 + $0x10] sm:$0xff]
    %v197 = vld [vmem:[%s3 + $0x18] sm:$0xff]
    %v198 = vld [vmem:[%s4 + $0x2] sm:$0x1]
    %v199 = vlaneseq
    %v200 = vshrl.u32 %v199, 7
    %v201 = vsub.s32 0, %v200
    %v202 = vrot.slane %v198, %v201
    %v204 = vsel %vm31, %v193, 0
    %206 = vmatprep.subr.mxu0 0.0
    %207 = vmatpush1.msra.mxu0 %v194
    %208 = vmatprep.subr.mxu0 0.0
    %209 = vmatpush1.msra.mxu0 %v195
    %210 = vmatprep.subr.mxu0 0.0
    %211 = vmatpush1.msra.mxu0 %v196
    %212 = vmatprep.subr.mxu0 0.0
    %213 = vmatpush1.msra.mxu0 %v197
    %214 = vmatprep.subr.mxu0 0.0
    %215 = vmatpush1.msra.mxu0 0.0
    %216 = vmatprep.subr.mxu0 0.0
    %217 = vmatpush1.msra.mxu0 0.0
    %218 = vmatprep.subr.mxu0 0.0
    %219 = vmatpush1.msra.mxu0 0.0
    %220 = vmatprep.subr.mxu0 0.0
    %221 = vmatpush1.msra.mxu0 0.0
    %222 = vmatprep.subr.mxu0 0.0
    %223 = vmatpush1.msra.mxu0 0.0
    %224 = vmatprep.subr.mxu0 0.0
    %225 = vmatpush1.msra.mxu0 0.0
    %226 = vmatprep.subr.mxu0 0.0
    %227 = vmatpush1.msra.mxu0 0.0
    %228 = vmatprep.subr.mxu0 0.0
    %229 = vmatpush1.msra.mxu0 0.0
    %230 = vmatprep.subr.mxu0 0.0
    %231 = vmatpush1.msra.mxu0 0.0
    %232 = vmatprep.subr.mxu0 0.0
    %233 = vmatpush1.msra.mxu0 0.0
    %234 = vmatprep.subr.mxu0 0.0
    %235 = vmatpush1.msra.mxu0 0.0
    %236 = vmatprep.subr.mxu0 0.0
    %237 = vmatpush1.msra.mxu0 0.0
    %238 = vmatprep.subr.mxu0 0.0
    %239 = vmatpush1.msra.mxu0 0.0
    %240 = vmatprep.subr.mxu0 0.0
    %241 = vmatpush1.msra.mxu0 0.0
    %242 = vmatprep.subr.mxu0 0.0
    %243 = vmatpush1.msra.mxu0 0.0
    %244 = vmatprep.subr.mxu0 0.0
    %245 = vmatpush1.msra.mxu0 0.0
    %246 = vmatprep.subr.mxu0 0.0
    %247 = vmatpush1.msra.mxu0 0.0
    %248 = vmatprep.subr.mxu0 0.0
    %249 = vmatpush1.msra.mxu0 0.0
    %250 = vmatprep.subr.mxu0 0.0
    %251 = vmatpush1.msra.mxu0 0.0
    %252 = vmatprep.subr.mxu0 0.0
    %253 = vmatpush1.msra.mxu0 0.0
    %254 = vmatprep.subr.mxu0 0.0
    %255 = vmatpush1.msra.mxu0 0.0
    %256 = vmatprep.subr.mxu0 0.0
    %257 = vmatpush1.msra.mxu0 0.0
    %258 = vmatprep.subr.mxu0 0.0
    %259 = vmatpush1.msra.mxu0 0.0
    %260 = vmatprep.subr.mxu0 0.0
    %261 = vmatpush1.msra.mxu0 0.0
    %262 = vmatprep.subr.mxu0 0.0
    %263 = vmatpush1.msra.mxu0 0.0
    %264 = vmatprep.subr.mxu0 0.0
    %265 = vmatpush1.msra.mxu0 0.0
    %266 = vmatprep.subr.mxu0 0.0
    %267 = vmatpush1.msra.mxu0 0.0
    %268 = vmatprep.subr.mxu0 0.0
    %269 = vmatpush1.msra.mxu0 0.0
    %270 = vmatprep.mubr.f32.mxu0 0.0
    %271 = vmatmul.mubr.f32.gmra.mrb[0].mxu0 %v204
    %v272 = vpop.f32.mrb[0].mxu0
    %v273 = vadd.f32 %v202, %v272
    %v274 = vpop.f32.mrb[0].mxu0
    %275 = vdwg.mxu0
    %276 = vst [vmem:[#allocation2] sm:$0xff] %v273
    // Predicated region
    $region22: #{tpu_custom_call.1} parent=1 // pred_check
      _
    $region23: #{tpu_custom_call.1} parent=1 // pred_check_branch
      %278 = sbr.rel (0) target = $region25
    $region24: #{tpu_custom_call.1} parent=1 // pred_region
      %s280 = ssub.s32 128, 128
      %281 = vsyncadd [#allocation3], %s280
      %s283 = sshll.u32 [#allocation2], 4
      %s284 = int_to_ptr.vmem [resolvable:$true] %s283
      %286 = dma.vmem_to_hbm [thread:$0]  %s284, 128, %s5, [#allocation3]
    $region25: #{tpu_custom_call.1} parent=1 // pred_fallthru
      _
    // Predicated region
    $region26: #{tpu_custom_call.1} parent=1 // pred_check
      _
    $region27: #{tpu_custom_call.1} parent=1 // pred_check_branch
      %288 = sbr.rel (0) target = $region29
    $region28: #{tpu_custom_call.1} parent=1 // pred_region
      %289 = dma.done [#allocation3], 128
    $region29: #{tpu_custom_call.1} parent=1 // pred_fallthru
      _
    %290 = vsyncpa [#allocation3], 1

</llo_original>
